<compile_context>
chip_gen: v6e
topology: v6e:2x2x1
jax: 0.10.0
libtpu: 0.0.40
codegen_flags: <defaults>
</compile_context>

<pallas_src>
import functools

import jax
import jax.numpy as jnp
from jax.experimental import pallas as pl
from jax.experimental.pallas import tpu as pltpu

_MIB = 1024 * 1024


def _pool_matmul_kernel(x_ref, p_ref, o_ref, *, inv_k2):
    # x_ref: (block_m, g*k*W)  native dtype; each row = g bands of (k rows x W cols)
    # p_ref: (g*k*W, g*out_w)  exact 0/1 window-membership matrix (block-diagonal)
    # o_ref: (block_m, g*out_w)
    # One MXU matmul computes every k*k window sum; accumulate in f32, apply the
    # 1/k^2 scale once in f32 (sum-then-scale like the reference), then cast.
    acc = jnp.dot(x_ref[...], p_ref[...], preferred_element_type=jnp.float32)
    o_ref[...] = (acc * inv_k2).astype(o_ref.dtype)


def _tpu_generation_params():
    """(x_tile_target_bytes, vmem_limit_bytes, num_tensorcores) for the local chip."""
    vmem = 128 * _MIB
    try:
        vmem = int(getattr(pltpu.get_tpu_info(), "vmem_capacity_bytes", vmem))
    except Exception:
        pass
    kind = ""
    try:
        kind = jax.devices()[0].device_kind.lower()
    except Exception:
        pass
    if "v7" in kind or vmem <= 64 * _MIB:
        # v7x: 64 MiB VMEM *per TensorCore*, 2 TCs per chip -> budget against 64 MiB.
        return 7 * _MIB, 56 * _MIB, 2
    if "v5e" in kind or "v5 lite" in kind or "v5lite" in kind:
        # v5e: 128 MiB VMEM, single TC, lower HBM BW -> ~5 MiB tiles suffice.
        return 5 * _MIB, 48 * _MIB, 1
    if "v6" in kind:
        # v6e: 128 MiB VMEM, single TC.
        return 10 * _MIB, 80 * _MIB, 1
    # Unknown generation reporting >=128 MiB VMEM: stay a bit conservative.
    return 8 * _MIB, 64 * _MIB, 1


def _pick_group(m_total, out_w, k, w, itemsize, p_cap_bytes=1 * _MIB):
    """Number of output rows fused into one kernel row.

    Chooses the smallest g dividing m_total with g*out_w >= 128 so the output
    block is lane-dense while the MXU intensity (2*g*out_w/itemsize flop/byte)
    stays near the HBM roofline knee.  Falls back to the largest divisible g
    below that (or 1) if no grouping reaches 128 lanes or P would get big.
    """
    if out_w >= 128 or m_total <= 1:
        return 1
    best = 1
    for g in range(1, min(m_total, 512) + 1):
        if m_total % g:
            continue
        if (g * k * w) * (g * out_w) * itemsize > p_cap_bytes:
            break
        best = g
        if g * out_w >= 128:
            break
    return best


def _choose_block_m(m, x_row_bytes, out_row_bytes, acc_row_bytes, fixed_bytes,
                    x_tile_target, vmem_limit, num_tc):
    """Rows of the (m, g*k*W) input processed per grid step (multiple of 8 or full)."""
    if m <= 8:
        return m
    # Double-buffered x and out tiles + f32 accumulator (with slack for temps);
    # fixed_bytes covers the constant-index P matrix (double-buffered by default).
    per_row = 2 * x_row_bytes + 2 * out_row_bytes + 2 * acc_row_bytes
    budget = max(per_row, int(0.8 * vmem_limit) - fixed_bytes)
    block = min(m, budget // per_row, max(8, x_tile_target // max(1, x_row_bytes)))
    if block < m:
        block = max(8, (int(block) // 8) * 8)
    else:
        block = m
    if num_tc > 1 and m >= 16 and block >= m:
        # v7x has 2 TensorCores: force >=2 "parallel" grid steps so megacore
        # sharding has something to split.  Single-TC chips keep one big tile.
        block = max(8, (((m + 1) // 2 + 7) // 8) * 8)
        if block > m:
            block = m
    return int(block)


def avg_pool2d(x, kernel_size, stride=None):
    """Pallas AvgPool2d matching the PySyft python port (NCHW, stride == kernel_size)."""
    if stride is None:
        stride = kernel_size
    assert stride == kernel_size, "reference semantics require stride == kernel_size"
    k = int(kernel_size)

    B, C, H, W = x.shape
    assert H % k == 0 and W % k == 0, "reference assumes evenly divisible spatial dims"
    dtype = x.dtype
    assert jnp.issubdtype(dtype, jnp.floating), "AvgPool2d kernel expects a floating dtype"

    out_h, out_w = H // k, W // k
    BC = B * C
    itemsize = jnp.dtype(dtype).itemsize
    inv_k2 = 1.0 / (k * k)

    x_tile_target, vmem_limit, num_tc = _tpu_generation_params()

    m_total = BC * out_h                       # one logical row per (b, c, output-row)
    g = _pick_group(m_total, out_w, k, W, itemsize)
    m = m_total // g
    kd = g * k * W                             # contraction dim (lane-dense input rows)
    nd = g * out_w                             # output lanes (>=128 when a grouping exists)

    # Exact 0/1 window-membership matrix, block-diagonal over the g fused rows:
    #   P[(gi*k + r)*W + w, gj*out_w + ow] = (gi == gj) and (w // k == ow)
    col_hit = (jnp.arange(W)[:, None] // k) == jnp.arange(out_w)[None, :]   # (W, out_w)
    band = jnp.tile(col_hit, (k, 1))                                        # (k*W, out_w)
    eye_g = jnp.eye(g, dtype=bool)                                          # (g, g)
    p_mat = (eye_g[:, None, :, None] & band[None, :, None, :]).reshape(kd, nd)
    p_mat = p_mat.astype(dtype)                                             # exact 0/1

    x2d = x.reshape(m, kd)                     # pure row-major regrouping (free)

    x_row_bytes = kd * itemsize
    out_row_bytes = nd * itemsize
    acc_row_bytes = nd * 4                     # f32 matmul result before the cast
    fixed_bytes = 2 * kd * nd * itemsize       # P is double-buffered by default
    block_m = _choose_block_m(m, x_row_bytes, out_row_bytes, acc_row_bytes,
                              fixed_bytes, x_tile_target, vmem_limit, num_tc)

    cost = pl.CostEstimate(
        flops=2 * m * kd * nd,
        transcendentals=0,
        bytes_accessed=itemsize * (m * kd + m * nd + kd * nd),
    )

    out2d = pl.pallas_call(
        functools.partial(_pool_matmul_kernel, inv_k2=inv_k2),
        out_shape=jax.ShapeDtypeStruct((m, nd), dtype),
        grid=(pl.cdiv(m, block_m),),
        in_specs=[
            pl.BlockSpec((block_m, kd), lambda i: (i, 0)),
            pl.BlockSpec((kd, nd), lambda i: (0, 0)),
        ],
        out_specs=pl.BlockSpec((block_m, nd), lambda i: (i, 0)),
        compiler_params=pltpu.CompilerParams(
            dimension_semantics=("parallel",),
            vmem_limit_bytes=int(vmem_limit),
        ),
        cost_estimate=cost,
    )(x2d, p_mat)

    return out2d.reshape(B, C, out_h, out_w)


def _reference_avgpool(x, k):
    """Pure-JAX mirror of the PyTorch module's forward (stride == kernel_size)."""
    B, C, H, W = x.shape
    xr = x.reshape(B, C, H // k, k, W // k, k)
    return xr.sum(axis=(3, 5)) * (1.0 / (k * k))


if __name__ == "__main__":
    key = jax.random.PRNGKey(0)
    k1, k2, k3 = jax.random.split(key, 3)

    # 1) The module's test shape: (2, 4, 16, 16), k=2 -> grouped rows (g*out_w = 128).
    x1 = jax.random.normal(k1, (2, 4, 16, 16), dtype=jnp.float32)
    o1 = jax.block_until_ready(avg_pool2d(x1, 2))
    r1 = _reference_avgpool(x1, 2)
    assert o1.shape == (2, 4, 8, 8), o1.shape
    assert jnp.allclose(o1, r1, atol=1e-5, rtol=1e-5), "case 1 mismatch"

    # 2) Wide image: out_w = 128 -> no grouping (g = 1), lane-dense input and output.
    x2 = jax.random.normal(k2, (1, 2, 16, 256), dtype=jnp.float32)
    o2 = jax.block_until_ready(avg_pool2d(x2, 2))
    r2 = _reference_avgpool(x2, 2)
    assert o2.shape == (1, 2, 8, 128), o2.shape
    assert jnp.allclose(o2, r2, atol=1e-5, rtol=1e-5), "case 2 mismatch"

    # 3) Non-power-of-two kernel (k=3): exercises the f32 sum-then-scale path.
    x3 = jax.random.normal(k3, (2, 3, 24, 48), dtype=jnp.float32)
    o3 = jax.block_until_ready(avg_pool2d(x3, 3))
    r3 = _reference_avgpool(x3, 3)
    assert o3.shape == (2, 3, 8, 16), o3.shape
    assert jnp.allclose(o3, r3, atol=1e-5, rtol=1e-5), "case 3 mismatch"

    print("KERNEL_OK")
</pallas_src>

<mosaic_0001>
module attributes {stable_mosaic.version = 11 : i64} {
  func.func @_pool_matmul_kernel(%arg0: i32, %arg1: memref<4x512xf32, #tpu.memory_space<vmem>>, %arg2: memref<512x128xf32, #tpu.memory_space<vmem>>, %arg3: memref<4x128xf32, #tpu.memory_space<vmem>>) attributes {dimension_semantics = [#tpu.dimension_semantics<parallel>], iteration_bounds = array<i64: 1>, scalar_prefetch = 0 : i64, scratch_operands = 0 : i64, tpu.core_type = #tpu.core_type<tc>, window_params = [{transform_indices = @transform_0, window_bounds = array<i64: 4, 512>}, {pipeline_mode = #tpu.pipeline_mode<synchronous>, transform_indices = @transform_1, window_bounds = array<i64: 512, 128>}, {transform_indices = @transform_2, window_bounds = array<i64: 4, 128>}]} {
    %c0 = arith.constant 0 : index
    %c0_0 = arith.constant 0 : index
    %0 = vector.load %arg1[%c0, %c0_0] : memref<4x512xf32, #tpu.memory_space<vmem>>, vector<4x512xf32>
    %c0_1 = arith.constant 0 : index
    %c0_2 = arith.constant 0 : index
    %1 = vector.load %arg2[%c0_1, %c0_2] : memref<512x128xf32, #tpu.memory_space<vmem>>, vector<512x128xf32>
    %cst = arith.constant dense<0.000000e+00> : vector<4x128xf32>
    %2 = tpu.matmul %0, %1, %cst {dimension_numbers = #tpu.dot_dimension_numbers<[1], [0], [0], [1], [0, 0, 1, 1], [], []>} : vector<4x512xf32>, vector<512x128xf32>, vector<4x128xf32> -> vector<4x128xf32>
    %cst_3 = arith.constant 2.500000e-01 : f32
    %3 = vector.broadcast %cst_3 : f32 to vector<4x128xf32>
    %4 = arith.mulf %2, %3 : vector<4x128xf32>
    %c0_4 = arith.constant 0 : index
    %c0_5 = arith.constant 0 : index
    %5 = vector.load %arg3[%c0_4, %c0_5] : memref<4x128xf32, #tpu.memory_space<vmem>>, vector<4x128xf32>
    tpu.vector_store %arg3[%c0_4, %c0_5], %4 {strides = array<i32>} : memref<4x128xf32, #tpu.memory_space<vmem>>, vector<4x128xf32>,
    return
  }
  func.func @transform_0(%arg0: i32) -> (i32, i32) {
    %c0_i32 = arith.constant 0 : i32
    %c0_i32_0 = arith.constant 0 : i32
    return %arg0, %c0_i32 : i32, i32
  }
  func.func @transform_1(%arg0: i32) -> (i32, i32) {
    %c0_i32 = arith.constant 0 : i32
    %c0_i32_0 = arith.constant 0 : i32
    %c0_i32_1 = arith.constant 0 : i32
    return %c0_i32, %c0_i32_0 : i32, i32
  }
  func.func @transform_2(%arg0: i32) -> (i32, i32) {
    %c0_i32 = arith.constant 0 : i32
    %c0_i32_0 = arith.constant 0 : i32
    return %arg0, %c0_i32 : i32, i32
  }
}

</mosaic_0001>

<llo_original>
// kernel: tpu_custom_call.1
$region0: #{tpu_custom_call.1}
  #allocation0 [shape = 'u32[]', space=smem, size = 0x4, offset = 0x4, fixed_abs, tag = 'smem constant byte address 0x4 - core index']
  #allocation1 [shape = 'u32[144,128]{1,0:T(1,128)}', space=vmem, size = 0x12000, scoped, tag = 'internal scratch']
  %s0 = inlined_call_operand.hbm [shape: f32[4,512], index: 0, kind: input, shape index: {}]
  %s1 = inlined_call_operand.hbm [shape: f32[512,128], index: 1, kind: input, shape index: {}]
  %s2 = inlined_call_operand.hbm [shape: f32[4,128], index: 2, kind: output, shape index: {}]
  %s3 = sld [smem:[#allocation0]]
  $region26: #{tpu_custom_call.1} parent=0
    _
  %s5 = ssub.s32 1, %s3
  %s6 = scalar_select 0, %s5, %s3
  $region1: #{tpu_custom_call.1} parent=0
    #allocation2 [shape = 'u8[8192]{0}', space=vmem, size = 0x2000, scoped, tag = 'input window, operand 0, single buffered']
    #allocation3 [shape = 's32[1]{0}', space=sflag, size = 0x4, scoped, tag = 'scoped memory for tpu_custom_call.1']
    #allocation4 [shape = 's32[1]{0}', space=sflag, size = 0x4, scoped, tag = 'scoped memory for tpu_custom_call.1']
    #allocation5 [shape = 'u8[262144]{0}', space=vmem, size = 0x40000, scoped, tag = 'input window, operand 1, single buffered']
    #allocation6 [shape = 's32[1]{0}', space=sflag, size = 0x4, scoped, tag = 'scoped memory for tpu_custom_call.1']
    #allocation7 [shape = 'u8[2048]{0}', space=vmem, size = 0x800, scoped, tag = 'output window, operand 0, single buffered']
    %7 = vsyncpa [#allocation3], 0
    %8 = vsyncpa [#allocation6], 0
    %9 = vsyncpa [#allocation4], 0
    // Predicated region
    $region2: #{tpu_custom_call.1} parent=1 // pred_check
      _
    $region3: #{tpu_custom_call.1} parent=1 // pred_check_branch
      %11 = sbr.rel (0) target = $region5
    $region4: #{tpu_custom_call.1} parent=1 // pred_region
      %s13 = ssub.s32 256, 256
      %14 = vsyncadd [#allocation3], %s13
      %s16 = sshll.u32 [#allocation2], 4
      %s17 = int_to_ptr.vmem [resolvable:$true] %s16
      %19 = dma.hbm_to_vmem [thread:$0]  %s0, 256, %s17, [#allocation3]
    $region5: #{tpu_custom_call.1} parent=1 // pred_fallthru
      _
    // Predicated region
    $region6: #{tpu_custom_call.1} parent=1 // pred_check
      _
    $region7: #{tpu_custom_call.1} parent=1 // pred_check_branch
      %21 = sbr.rel (0) target = $region9
    $region8: #{tpu_custom_call.1} parent=1 // pred_region
      %s23 = ssub.s32 8192, 8192
      %24 = vsyncadd [#allocation6], %s23
      %s25 = sshll.u32 [#allocation5], 4
      %s26 = int_to_ptr.vmem [resolvable:$true] %s25
      %31 = dma.hbm_to_vmem [thread:$0]  %s1, 8192, %s26, [#allocation6], 128, 128, 8
    $region9: #{tpu_custom_call.1} parent=1 // pred_fallthru
      _
    // Predicated region
    $region10: #{tpu_custom_call.1} parent=1 // pred_check
      _
    $region11: #{tpu_custom_call.1} parent=1 // pred_check_branch
      %33 = sbr.rel (0) target = $region13
    $region12: #{tpu_custom_call.1} parent=1 // pred_region
      %34 = dma.done [#allocation3], 256
    $region13: #{tpu_custom_call.1} parent=1 // pred_fallthru
      _
    // Predicated region
    $region14: #{tpu_custom_call.1} parent=1 // pred_check
      _
    $region15: #{tpu_custom_call.1} parent=1 // pred_check_branch
      %36 = sbr.rel (0) target = $region17
    $region16: #{tpu_custom_call.1} parent=1 // pred_region
      %37 = dma.done [#allocation6], 8192
    $region17: #{tpu_custom_call.1} parent=1 // pred_fallthru
      _
    %v38 = vld [vmem:[#allocation2] sm:$0xff]
    %v39 = vld [vmem:[#allocation2 + $0x8] sm:$0xff]
    %v40 = vld [vmem:[#allocation5] sm:$0xff]
    %v41 = vld [vmem:[#allocation5 + $0x8] sm:$0xff]
    %v42 = vld [vmem:[#allocation5 + $0x10] sm:$0xff]
    %v43 = vld [vmem:[#allocation5 + $0x18] sm:$0xff]
    %v44 = vld [vmem:[#allocation5 + $0x20] sm:$0xff]
    %v45 = vld [vmem:[#allocation5 + $0x28] sm:$0xff]
    %v46 = vld [vmem:[#allocation5 + $0x30] sm:$0xff]
    %v47 = vld [vmem:[#allocation5 + $0x38] sm:$0xff]
    %v48 = vld [vmem:[#allocation5 + $0x40] sm:$0xff]
    %v49 = vld [vmem:[#allocation5 + $0x48] sm:$0xff]
    %v50 = vld [vmem:[#allocation5 + $0x50] sm:$0xff]
    %v51 = vld [vmem:[#allocation5 + $0x58] sm:$0xff]
    %v52 = vld [vmem:[#allocation5 + $0x60] sm:$0xff]
    %v53 = vld [vmem:[#allocation5 + $0x68] sm:$0xff]
    %v54 = vld [vmem:[#allocation5 + $0x70] sm:$0xff]
    %v55 = vld [vmem:[#allocation5 + $0x78] sm:$0xff]
    %v56 = vld [vmem:[#allocation5 + $0x80] sm:$0xff]
    %v57 = vld [vmem:[#allocation5 + $0x88] sm:$0xff]
    %v58 = vld [vmem:[#allocation5 + $0x90] sm:$0xff]
    %v59 = vld [vmem:[#allocation5 + $0x98] sm:$0xff]
    %v60 = vld [vmem:[#allocation5 + $0xa0] sm:$0xff]
    %v61 = vld [vmem:[#allocation5 + $0xa8] sm:$0xff]
    %v62 = vld [vmem:[#allocation5 + $0xb0] sm:$0xff]
    %v63 = vld [vmem:[#allocation5 + $0xb8] sm:$0xff]
    %v64 = vld [vmem:[#allocation5 + $0xc0] sm:$0xff]
    %v65 = vld [vmem:[#allocation5 + $0xc8] sm:$0xff]
    %v66 = vld [vmem:[#allocation5 + $0xd0] sm:$0xff]
    %v67 = vld [vmem:[#allocation5 + $0xd8] sm:$0xff]
    %v68 = vld [vmem:[#allocation5 + $0xe0] sm:$0xff]
    %v69 = vld [vmem:[#allocation5 + $0xe8] sm:$0xff]
    %v70 = vld [vmem:[#allocation5 + $0xf0] sm:$0xff]
    %v71 = vld [vmem:[#allocation5 + $0xf8] sm:$0xff]
    %v72 = vld [vmem:[#allocation5 + $0x100] sm:$0xff]
    %v73 = vld [vmem:[#allocation5 + $0x108] sm:$0xff]
    %v74 = vld [vmem:[#allocation5 + $0x110] sm:$0xff]
    %v75 = vld [vmem:[#allocation5 + $0x118] sm:$0xff]
    %v76 = vld [vmem:[#allocation5 + $0x120] sm:$0xff]
    %v77 = vld [vmem:[#allocation5 + $0x128] sm:$0xff]
    %v78 = vld [vmem:[#allocation5 + $0x130] sm:$0xff]
    %v79 = vld [vmem:[#allocation5 + $0x138] sm:$0xff]
    %v80 = vld [vmem:[#allocation5 + $0x140] sm:$0xff]
    %v81 = vld [vmem:[#allocation5 + $0x148] sm:$0xff]
    %v82 = vld [vmem:[#allocation5 + $0x150] sm:$0xff]
    %v83 = vld [vmem:[#allocation5 + $0x158] sm:$0xff]
    %v84 = vld [vmem:[#allocation5 + $0x160] sm:$0xff]
    %v85 = vld [vmem:[#allocation5 + $0x168] sm:$0xff]
    %v86 = vld [vmem:[#allocation5 + $0x170] sm:$0xff]
    %v87 = vld [vmem:[#allocation5 + $0x178] sm:$0xff]
    %v88 = vld [vmem:[#allocation5 + $0x180] sm:$0xff]
    %v89 = vld [vmem:[#allocation5 + $0x188] sm:$0xff]
    %v90 = vld [vmem:[#allocation5 + $0x190] sm:$0xff]
    %v91 = vld [vmem:[#allocation5 + $0x198] sm:$0xff]
    %v92 = vld [vmem:[#allocation5 + $0x1a0] sm:$0xff]
    %v93 = vld [vmem:[#allocation5 + $0x1a8] sm:$0xff]
    %v94 = vld [vmem:[#allocation5 + $0x1b0] sm:$0xff]
    %v95 = vld [vmem:[#allocation5 + $0x1b8] sm:$0xff]
    %v96 = vld [vmem:[#allocation5 + $0x1c0] sm:$0xff]
    %v97 = vld [vmem:[#allocation5 + $0x1c8] sm:$0xff]
    %v98 = vld [vmem:[#allocation5 + $0x1d0] sm:$0xff]
    %v99 = vld [vmem:[#allocation5 + $0x1d8] sm:$0xff]
    %v100 = vld [vmem:[#allocation5 + $0x1e0] sm:$0xff]
    %v101 = vld [vmem:[#allocation5 + $0x1e8] sm:$0xff]
    %v102 = vld [vmem:[#allocation5 + $0x1f0] sm:$0xff]
    %v103 = vld [vmem:[#allocation5 + $0x1f8] sm:$0xff]
    %v106 = vcombine.high %v38, %v38
    %v107 = vcombine.high %v39, %v39
    %110 = vmatprep.subr.mxu0 0.0
    %111 = vmatpush1.msra.mxu0 %v55
    %112 = vmatprep.subr.mxu0 0.0
    %113 = vmatpush1.msra.mxu0 %v54
    %114 = vmatprep.subr.mxu0 0.0
    %115 = vmatpush1.msra.mxu0 %v53
    %116 = vmatprep.subr.mxu0 0.0
    %117 = vmatpush1.msra.mxu0 %v52
    %118 = vmatprep.subr.mxu0 0.0
    %119 = vmatpush1.msra.mxu0 %v51
    %120 = vmatprep.subr.mxu0 0.0
    %121 = vmatpush1.msra.mxu0 %v50
    %122 = vmatprep.subr.mxu0 0.0
    %123 = vmatpush1.msra.mxu0 %v49
    %124 = vmatprep.subr.mxu0 0.0
    %125 = vmatpush1.msra.mxu0 %v48
    %126 = vmatprep.subr.mxu0 0.0
    %127 = vmatpush1.msra.mxu0 %v47
    %128 = vmatprep.subr.mxu0 0.0
    %129 = vmatpush1.msra.mxu0 %v46
    %130 = vmatprep.subr.mxu0 0.0
    %131 = vmatpush1.msra.mxu0 %v45
    %132 = vmatprep.subr.mxu0 0.0
    %133 = vmatpush1.msra.mxu0 %v44
    %134 = vmatprep.subr.mxu0 0.0
    %135 = vmatpush1.msra.mxu0 %v43
    %136 = vmatprep.subr.mxu0 0.0
    %137 = vmatpush1.msra.mxu0 %v42
    %138 = vmatprep.subr.mxu0 0.0
    %139 = vmatpush1.msra.mxu0 %v41
    %140 = vmatprep.subr.mxu0 0.0
    %141 = vmatpush1.msra.mxu0 %v40
    %142 = vmatprep.subr.mxu0 0.0
    %143 = vmatpush2.msra.mxu0 %v71
    %144 = vmatprep.subr.mxu0 0.0
    %145 = vmatpush2.msra.mxu0 %v70
    %146 = vmatprep.subr.mxu0 0.0
    %147 = vmatpush2.msra.mxu0 %v69
    %148 = vmatprep.subr.mxu0 0.0
    %149 = vmatpush2.msra.mxu0 %v68
    %150 = vmatprep.subr.mxu0 0.0
    %151 = vmatpush2.msra.mxu0 %v67
    %152 = vmatprep.subr.mxu0 0.0
    %153 = vmatpush2.msra.mxu0 %v66
    %154 = vmatprep.subr.mxu0 0.0
    %155 = vmatpush2.msra.mxu0 %v65
    %156 = vmatprep.subr.mxu0 0.0
    %157 = vmatpush2.msra.mxu0 %v64
    %158 = vmatprep.subr.mxu0 0.0
    %159 = vmatpush2.msra.mxu0 %v63
    %160 = vmatprep.subr.mxu0 0.0
    %161 = vmatpush2.msra.mxu0 %v62
    %162 = vmatprep.subr.mxu0 0.0
    %163 = vmatpush2.msra.mxu0 %v61
    %164 = vmatprep.subr.mxu0 0.0
    %165 = vmatpush2.msra.mxu0 %v60
    %166 = vmatprep.subr.mxu0 0.0
    %167 = vmatpush2.msra.mxu0 %v59
    %168 = vmatprep.subr.mxu0 0.0
    %169 = vmatpush2.msra.mxu0 %v58
    %170 = vmatprep.subr.mxu0 0.0
    %171 = vmatpush2.msra.mxu0 %v57
    %172 = vmatprep.subr.mxu0 0.0
    %173 = vmatpush2.msra.mxu0 %v56
    %174 = vmatprep.mubr.f32.mxu0 %v106
    %175 = vmatmul.mubr.f32.gmra.mxu0 %v38
    %v176 = vpop.f32.mrf.mxu0
    %v177 = vadd.f32 0.0, %v176
    %v178 = vpop.f32.mrf.mxu0
    %179 = vdwg.mxu0
    %180 = vmatprep.subr.mxu0 0.0
    %181 = vmatpush1.msra.mxu0 %v87
    %182 = vmatprep.subr.mxu0 0.0
    %183 = vmatpush1.msra.mxu0 %v86
    %184 = vmatprep.subr.mxu0 0.0
    %185 = vmatpush1.msra.mxu0 %v85
    %186 = vmatprep.subr.mxu0 0.0
    %187 = vmatpush1.msra.mxu0 %v84
    %188 = vmatprep.subr.mxu0 0.0
    %189 = vmatpush1.msra.mxu0 %v83
    %190 = vmatprep.subr.mxu0 0.0
    %191 = vmatpush1.msra.mxu0 %v82
    %192 = vmatprep.subr.mxu0 0.0
    %193 = vmatpush1.msra.mxu0 %v81
    %194 = vmatprep.subr.mxu0 0.0
    %195 = vmatpush1.msra.mxu0 %v80
    %196 = vmatprep.subr.mxu0 0.0
    %197 = vmatpush1.msra.mxu0 %v79
    %198 = vmatprep.subr.mxu0 0.0
    %199 = vmatpush1.msra.mxu0 %v78
    %200 = vmatprep.subr.mxu0 0.0
    %201 = vmatpush1.msra.mxu0 %v77
    %202 = vmatprep.subr.mxu0 0.0
    %203 = vmatpush1.msra.mxu0 %v76
    %204 = vmatprep.subr.mxu0 0.0
    %205 = vmatpush1.msra.mxu0 %v75
    %206 = vmatprep.subr.mxu0 0.0
    %207 = vmatpush1.msra.mxu0 %v74
    %208 = vmatprep.subr.mxu0 0.0
    %209 = vmatpush1.msra.mxu0 %v73
    %210 = vmatprep.subr.mxu0 0.0
    %211 = vmatpush1.msra.mxu0 %v72
    %212 = vmatprep.subr.mxu0 0.0
    %213 = vmatpush2.msra.mxu0 %v103
    %214 = vmatprep.subr.mxu0 0.0
    %215 = vmatpush2.msra.mxu0 %v102
    %216 = vmatprep.subr.mxu0 0.0
    %217 = vmatpush2.msra.mxu0 %v101
    %218 = vmatprep.subr.mxu0 0.0
    %219 = vmatpush2.msra.mxu0 %v100
    %220 = vmatprep.subr.mxu0 0.0
    %221 = vmatpush2.msra.mxu0 %v99
    %222 = vmatprep.subr.mxu0 0.0
    %223 = vmatpush2.msra.mxu0 %v98
    %224 = vmatprep.subr.mxu0 0.0
    %225 = vmatpush2.msra.mxu0 %v97
    %226 = vmatprep.subr.mxu0 0.0
    %227 = vmatpush2.msra.mxu0 %v96
    %228 = vmatprep.subr.mxu0 0.0
    %229 = vmatpush2.msra.mxu0 %v95
    %230 = vmatprep.subr.mxu0 0.0
    %231 = vmatpush2.msra.mxu0 %v94
    %232 = vmatprep.subr.mxu0 0.0
    %233 = vmatpush2.msra.mxu0 %v93
    %234 = vmatprep.subr.mxu0 0.0
    %235 = vmatpush2.msra.mxu0 %v92
    %236 = vmatprep.subr.mxu0 0.0
    %237 = vmatpush2.msra.mxu0 %v91
    %238 = vmatprep.subr.mxu0 0.0
    %239 = vmatpush2.msra.mxu0 %v90
    %240 = vmatprep.subr.mxu0 0.0
    %241 = vmatpush2.msra.mxu0 %v89
    %242 = vmatprep.subr.mxu0 0.0
    %243 = vmatpush2.msra.mxu0 %v88
    %244 = vmatprep.mubr.f32.mxu0 %v107
    %245 = vmatmul.mubr.f32.gmra.mxu0 %v39
    %v246 = vpop.f32.mrf.mxu0
    %v247 = vadd.f32 %v177, %v246
    %v248 = vpop.f32.mrf.mxu0
    %249 = vdwg.mxu0
    %v250 = vmul.f32 %v247, 0.25
    %251 = vst [vmem:[#allocation7] sm:$0xf] %v250
    // Predicated region
    $region18: #{tpu_custom_call.1} parent=1 // pred_check
      _
    $region19: #{tpu_custom_call.1} parent=1 // pred_check_branch
      %253 = sbr.rel (0) target = $region21
    $region20: #{tpu_custom_call.1} parent=1 // pred_region
      %s255 = ssub.s32 64, 64
      %256 = vsyncadd [#allocation4], %s255
      %s258 = sshll.u32 [#allocation7], 4
      %s259 = int_to_ptr.vmem [resolvable:$true] %s258
      %261 = dma.vmem_to_hbm [thread:$0]  %s259, 64, %s2, [#allocation4]
    $region21: #{tpu_custom_call.1} parent=1 // pred_fallthru
      _
    // Predicated region
    $region22: #{tpu_custom_call.1} parent=1 // pred_check
      _
    $region23: #{tpu_custom_call.1} parent=1 // pred_check_branch
      %263 = sbr.rel (0) target = $region25
    $region24: #{tpu_custom_call.1} parent=1 // pred_region
      %264 = dma.done [#allocation4], 64
    $region25: #{tpu_custom_call.1} parent=1 // pred_fallthru
      _
    %265 = vsyncpa [#allocation3], 1
    %266 = vsyncpa [#allocation6], 1
    %267 = vsyncpa [#allocation4], 1

</llo_original>
